<compile_context>
chip_gen: v6e
topology: v6e:2x2x1
jax: 0.10.0
libtpu: 0.0.40
codegen_flags: <defaults>
</compile_context>

<pallas_src>
import functools
import math

import jax
import jax.numpy as jnp
import numpy as np
from jax import lax
from jax.experimental import pallas as pl
from jax.experimental.pallas import tpu as pltpu


_LANE_WIDTH = 512                 # lane-dense width (multiple of 128)
_TARGET_BLOCK_BYTES = 4 << 20     # ~4 MiB f32 per input block
_VMEM_LIMIT_BYTES = 32 * 1024 * 1024


def _round_up(a, b):
    return ((a + b - 1) // b) * b


def _plan_tiles(total_elems, width=_LANE_WIDTH, target_bytes=_TARGET_BLOCK_BYTES):
    """Row count / row-tile / grid for a lane-dense (rows, width) f32 view."""
    rows = -(-total_elems // width)
    tm_cap = max(8, (target_bytes // (width * 4)) // 8 * 8)   # multiple of 8 sublanes
    tm = min(_round_up(rows, 8), tm_cap)
    grid_m = -(-rows // tm)
    return width, tm, grid_m


# ------------------------- whiten (z-transform) -------------------------

def _stats_kernel(x_ref, sum_ref, sq_ref):
    # One partial (8, W) accumulator per outer-grid slice; zero it on the first
    # inner step.  Accumulation is whole-vreg VALU adds (no per-step XLU reduce).
    @pl.when(pl.program_id(1) == 0)
    def _():
        sum_ref[...] = jnp.zeros_like(sum_ref)
        sq_ref[...] = jnp.zeros_like(sq_ref)

    x = x_ref[...].astype(jnp.float32)                 # (tm, W)
    xr = x.reshape(-1, 8, x.shape[-1])                 # (tm//8, 8, W): whole-tile regroup
    sum_ref[...] += jnp.sum(xr, axis=0, keepdims=True)
    sq_ref[...] += jnp.sum(xr * xr, axis=0, keepdims=True)


def _whiten_apply_kernel(so_ref, x_ref, o_ref):
    # so_ref (SMEM): [scale, offset] precomputed once outside the loop.
    scale = so_ref[0]
    offset = so_ref[1]
    o_ref[...] = (x_ref[...].astype(jnp.float32) * scale + offset).astype(o_ref.dtype)


def whiten_pallas(x):
    orig_shape = x.shape
    total = int(np.prod(orig_shape))
    W, tm, grid_m = _plan_tiles(total)

    n_split = 2                                   # expose both TensorCores on v7x
    grid_inner = -(-grid_m // n_split)
    padded_rows = n_split * grid_inner * tm
    pad = padded_rows * W - total

    flat = x.reshape(-1)
    if pad:
        flat = jnp.pad(flat, (0, pad))            # zeros: contribute 0 to sum / sumsq
    x2 = flat.reshape(padded_rows, W)

    sum_p, sq_p = pl.pallas_call(
        _stats_kernel,
        out_shape=(jax.ShapeDtypeStruct((n_split, 8, W), jnp.float32),
                   jax.ShapeDtypeStruct((n_split, 8, W), jnp.float32)),
        grid_spec=pltpu.PrefetchScalarGridSpec(
            num_scalar_prefetch=0,
            grid=(n_split, grid_inner),
            in_specs=[pl.BlockSpec((tm, W), lambda c, i: (c * grid_inner + i, 0))],
            out_specs=(pl.BlockSpec((1, 8, W), lambda c, i: (c, 0, 0)),
                       pl.BlockSpec((1, 8, W), lambda c, i: (c, 0, 0)))),
        compiler_params=pltpu.CompilerParams(
            dimension_semantics=("parallel", "arbitrary"),
            vmem_limit_bytes=_VMEM_LIMIT_BYTES),
    )(x2)

    # Final tiny cross-lane reduce + scalar math once, in plain JAX.
    n = jnp.float32(total)
    s = jnp.sum(sum_p)
    sq = jnp.sum(sq_p)
    mean = s / n
    # Unbiased variance (torch.Tensor.std() default); clamp >= 0 against cancellation.
    var = jnp.maximum((sq - s * s / n) / jnp.maximum(n - 1.0, 1.0), 0.0)
    inv_std = lax.rsqrt(var)
    scale_offset = jnp.stack([inv_std, -mean * inv_std]).astype(jnp.float32)

    out2 = pl.pallas_call(
        _whiten_apply_kernel,
        out_shape=jax.ShapeDtypeStruct((padded_rows, W), x.dtype),
        grid_spec=pltpu.PrefetchScalarGridSpec(
            num_scalar_prefetch=0,
            grid=(padded_rows // tm,),
            in_specs=[pl.BlockSpec(memory_space=pltpu.MemorySpace.SMEM),
                      pl.BlockSpec((tm, W), lambda i: (i, 0))],
            out_specs=pl.BlockSpec((tm, W), lambda i: (i, 0))),
        compiler_params=pltpu.CompilerParams(
            dimension_semantics=("parallel",),
            vmem_limit_bytes=_VMEM_LIMIT_BYTES),
    )(scale_offset, x2)

    out_flat = out2.reshape(-1)
    if pad:
        out_flat = out_flat[:total]
    return out_flat.reshape(orig_shape)


# ------------------------- AmplitudeToDB ('db') -------------------------

_AMIN = 1e-10
_MULTIPLIER = 10.0        # stype='power'
_REF = 1.0


def _amplitude_to_db_kernel(caps_ref, x_ref, o_ref, *, multiplier, amin, db_offset):
    # caps_ref (SMEM): per-batch-item clamp floor, precomputed via monotone log10.
    cap = caps_ref[pl.program_id(0)]
    x = x_ref[...].astype(jnp.float32)
    x_db = multiplier * jnp.log10(jnp.maximum(x, amin)) - db_offset
    o_ref[...] = jnp.maximum(x_db, cap).astype(o_ref.dtype)


def amplitude_to_db_pallas(x, top_db=80.0):
    B, C, F, T = x.shape
    n_item = C * F * T
    W, tm, grid_chunks = _plan_tiles(n_item)
    padded_rows = grid_chunks * tm
    pad = padded_rows * W - n_item

    db_multiplier = math.log10(max(_AMIN, _REF))
    db_offset = _MULTIPLIER * db_multiplier       # 0.0 for ref=1.0

    x2 = x.reshape(B, n_item)
    # log10 is monotone: per-item max of raw x gives the exact top_db cap.
    xmax = jnp.max(x2.astype(jnp.float32), axis=1)
    caps = (_MULTIPLIER * jnp.log10(jnp.maximum(xmax, _AMIN))
            - db_offset - jnp.float32(top_db)).astype(jnp.float32)

    if pad:
        x2 = jnp.pad(x2, ((0, 0), (0, pad)))
    x3 = x2.reshape(B, padded_rows, W)

    kernel = functools.partial(_amplitude_to_db_kernel,
                               multiplier=_MULTIPLIER, amin=_AMIN,
                               db_offset=float(db_offset))
    out3 = pl.pallas_call(
        kernel,
        out_shape=jax.ShapeDtypeStruct((B, padded_rows, W), x.dtype),
        grid_spec=pltpu.PrefetchScalarGridSpec(
            num_scalar_prefetch=0,
            grid=(B, padded_rows // tm),
            in_specs=[pl.BlockSpec(memory_space=pltpu.MemorySpace.SMEM),
                      pl.BlockSpec((1, tm, W), lambda b, i: (b, i, 0))],
            out_specs=pl.BlockSpec((1, tm, W), lambda b, i: (b, i, 0))),
        compiler_params=pltpu.CompilerParams(
            dimension_semantics=("parallel", "parallel"),
            vmem_limit_bytes=_VMEM_LIMIT_BYTES),
    )(caps, x3)

    out2 = out3.reshape(B, padded_rows * W)
    if pad:
        out2 = out2[:, :n_item]
    return out2.reshape(B, C, F, T)


# ------------------------- module wrapper -------------------------

class SpecNormalization:
    """JAX/Pallas port of the PyTorch SpecNormalization module (no parameters)."""

    def __init__(self, norm_type, top_db=80.0):
        if 'db' == norm_type:
            self._norm = functools.partial(amplitude_to_db_pallas, top_db=top_db)
        elif 'whiten' == norm_type:
            self._norm = whiten_pallas
        else:
            self._norm = lambda x: x

    def __call__(self, x):
        return self._norm(x)


# ------------------------- reference (pure JAX) -------------------------

def _whiten_ref(x):
    mean = jnp.mean(x)
    std = jnp.std(x, ddof=1)  # torch.Tensor.std() is unbiased
    return (x - mean) / std


def _db_ref(x, top_db=80.0):
    x_db = 10.0 * jnp.log10(jnp.maximum(x, 1e-10))
    cap = jnp.max(x_db, axis=(1, 2, 3), keepdims=True) - top_db
    return jnp.maximum(x_db, cap)


if __name__ == "__main__":
    key = jax.random.PRNGKey(0)
    # Power spectrogram-like positive input, NCHW: (B=2, C=4, F=16, T=16)
    x = jax.random.uniform(key, (2, 4, 16, 16), dtype=jnp.float32,
                           minval=1e-6, maxval=10.0)

    y_db = SpecNormalization('db')(x)
    y_wh = SpecNormalization('whiten')(x)
    y_id = SpecNormalization('other')(x)
    jax.block_until_ready((y_db, y_wh, y_id))

    np.testing.assert_allclose(np.asarray(y_db), np.asarray(_db_ref(x)),
                               rtol=1e-4, atol=1e-4)
    np.testing.assert_allclose(np.asarray(y_wh), np.asarray(_whiten_ref(x)),
                               rtol=1e-4, atol=1e-4)
    np.testing.assert_allclose(np.asarray(y_id), np.asarray(x))

    print("KERNEL_OK")
</pallas_src>

<mosaic_0001>
module attributes {stable_mosaic.version = 11 : i64} {
  func.func @_amplitude_to_db_kernel(%arg0: i32, %arg1: i32, %arg2: memref<2xf32, #tpu.memory_space<smem>>, %arg3: memref<1x8x512xf32, #tpu.memory_space<vmem>>, %arg4: memref<1x8x512xf32, #tpu.memory_space<vmem>>) attributes {dimension_semantics = [#tpu.dimension_semantics<parallel>, #tpu.dimension_semantics<parallel>], iteration_bounds = array<i64: 2, 1>, scalar_prefetch = 0 : i64, scratch_operands = 0 : i64, tpu.core_type = #tpu.core_type<tc>, window_params = [{transform_indices = @transform_0, window_bounds = array<i64: 2>}, {transform_indices = @transform_1, window_bounds = array<i64: 1, 8, 512>}, {transform_indices = @transform_2, window_bounds = array<i64: 1, 8, 512>}]} {
    %0 = arith.index_cast %arg0 : i32 to index
    %1 = memref.load %arg2[%0] : memref<2xf32, #tpu.memory_space<smem>>
    %c0 = arith.constant 0 : index
    %c0_0 = arith.constant 0 : index
    %c0_1 = arith.constant 0 : index
    %2 = vector.load %arg3[%c0, %c0_0, %c0_1] : memref<1x8x512xf32, #tpu.memory_space<vmem>>, vector<1x8x512xf32>
    %cst = arith.constant 1.000000e-10 : f32
    %3 = vector.broadcast %cst : f32 to vector<1x8x512xf32>
    %4 = arith.maximumf %2, %3 : vector<1x8x512xf32>
    %5 = math.log %4 : vector<1x8x512xf32>
    %cst_2 = arith.constant 0.434294492 : f32
    %6 = vector.broadcast %cst_2 : f32 to vector<1x8x512xf32>
    %7 = arith.mulf %5, %6 : vector<1x8x512xf32>
    %cst_3 = arith.constant 1.000000e+01 : f32
    %8 = vector.broadcast %cst_3 : f32 to vector<1x8x512xf32>
    %9 = arith.mulf %8, %7 : vector<1x8x512xf32>
    %cst_4 = arith.constant 0.000000e+00 : f32
    %10 = vector.broadcast %cst_4 : f32 to vector<1x8x512xf32>
    %11 = arith.subf %9, %10 : vector<1x8x512xf32>
    %12 = vector.broadcast %1 : f32 to vector<1x8x512xf32>
    %13 = arith.maximumf %11, %12 : vector<1x8x512xf32>
    %c0_5 = arith.constant 0 : index
    %c0_6 = arith.constant 0 : index
    %c0_7 = arith.constant 0 : index
    %14 = vector.load %arg4[%c0_5, %c0_6, %c0_7] : memref<1x8x512xf32, #tpu.memory_space<vmem>>, vector<1x8x512xf32>
    tpu.vector_store %arg4[%c0_5, %c0_6, %c0_7], %13 {strides = array<i32>} : memref<1x8x512xf32, #tpu.memory_space<vmem>>, vector<1x8x512xf32>,
    return
  }
  func.func @transform_0(%arg0: i32, %arg1: i32) -> i32 {
    %c0_i32 = arith.constant 0 : i32
    %c0_i32_0 = arith.constant 0 : i32
    return %c0_i32 : i32
  }
  func.func @transform_1(%arg0: i32, %arg1: i32) -> (i32, i32, i32) {
    %c0_i32 = arith.constant 0 : i32
    %c0_i32_0 = arith.constant 0 : i32
    return %arg0, %arg1, %c0_i32 : i32, i32, i32
  }
  func.func @transform_2(%arg0: i32, %arg1: i32) -> (i32, i32, i32) {
    %c0_i32 = arith.constant 0 : i32
    %c0_i32_0 = arith.constant 0 : i32
    return %arg0, %arg1, %c0_i32 : i32, i32, i32
  }
}

</mosaic_0001>

<llo_original>
// kernel: tpu_custom_call.1
$region0: #{tpu_custom_call.1}
  #allocation0 [shape = 'u32[]', space=smem, size = 0x4, offset = 0x4, fixed_abs, tag = 'smem constant byte address 0x4 - core index']
  #allocation1 [shape = 'u32[144,128]{1,0:T(1,128)}', space=vmem, size = 0x12000, scoped, tag = 'internal scratch']
  %s0 = inlined_call_operand.hbm [shape: f32[2], index: 0, kind: input, shape index: {}]
  %s1 = inlined_call_operand.hbm [shape: f32[2,8,512], index: 1, kind: input, shape index: {}]
  %s2 = inlined_call_operand.hbm [shape: f32[2,8,512], index: 2, kind: output, shape index: {}]
  %s3 = sld [smem:[#allocation0]]
  $region49: #{tpu_custom_call.1} parent=0
    _
  %s5 = ssub.s32 1, %s3
  %s6 = scalar_select 0, %s5, %s3
  $region1: #{tpu_custom_call.1} parent=0
    #allocation2 [shape = 'u8[512]{0}', space=smem, size = 0x200, scoped, tag = 'input window, operand 0, single buffered']
    #allocation3 [shape = 's32[2]{0}', space=sflag, size = 0x8, scoped, tag = 'scoped memory for tpu_custom_call.1']
    #allocation4 [shape = 's32[2]{0}', space=sflag, size = 0x8, scoped, tag = 'scoped memory for tpu_custom_call.1']
    #allocation5 [shape = 's32[2]{0}', space=sflag, size = 0x8, scoped, tag = 'scoped memory for tpu_custom_call.1']
    #allocation6 [shape = 'u8[32768]{0}', space=vmem, size = 0x8000, scoped, tag = 'input window, operand 1']
    #allocation7 [shape = 'u8[32768]{0}', space=vmem, size = 0x8000, scoped, tag = 'output window, operand 0']
    %7 = vsyncpa [#allocation5], 0
    %8 = vsyncpa [#allocation3], 0
    %s9 = scalar_lea.sflag [#allocation3], 1
    %10 = vsyncpa %s9, 0
    %11 = vsyncpa [#allocation4], 0
    %s12 = scalar_lea.sflag [#allocation4], 1
    %13 = vsyncpa %s12, 0
    loop: start=0, step=1, limit=4
    $region2: #{tpu_custom_call.1} parent=1 // loop_pre_header
      _
    $region3: #{tpu_custom_call.1} parent=1 // loop_header
      %s15 = sphi 0, %s19
      %p16 = scmp.ge.s32.totalorder %s15, 4
      %s22 = sphi 0, %s34
      %s23 = sphi 0, %s30
      %s24 = sphi 0, %s22
      %s25 = sphi 0, %s23
      %s26 = sphi 0, %s24
      %s27 = sphi 0, %s25
      %s35 = sphi 0, %s35
      %s37 = sphi 0, %s35
      %s38 = sphi 0, %s37
      %s52 = sphi 0, %s38
      %s60 = sphi 0, %s62
      %s63 = sphi 0, %s60
      %s64 = sphi 0, %s63
      %s80 = sphi 0, %s64
      %s88 = sphi 0, %s90
      %s91 = sphi 0, %s88
      %s92 = sphi 0, %s91
      %s108 = sphi 0, %s92
    $region4: #{tpu_custom_call.1} parent=1 // loop_header_branch
      %18 = sbr.rel (%p16) target = $region8
    $region5: #{tpu_custom_call.1} parent=1 // loop_body
      %s20 = ssub.s32 %s15, 1
      %s21 = ssub.s32 %s15, 2
      %s28 = sadd.s32 1, %s23
      %p29 = scmp.ge.s32.totalorder %s28, 1
      %s30 = scalar_select %p29, 0, %s28
      %s31 = sadd.s32 1, %s22
      %s32 = scalar_select %p29, %s31, %s22
      %p33 = scmp.ge.s32.totalorder %s32, 2
      %s34 = scalar_select %p33, 0, %s32
      %s36 = sadd.s32 %s35, 1
      %p39 = scmp.eq.s32.totalorder %s15, 1
      %p40 = scmp.ne.s32.totalorder %s35, %s37
      %p41 = scmp.eq.s32.totalorder %s15, 0
      %p42 = por %p40, %p41
      %p43 = scmp.ne.s32.totalorder %s35, %s37
      %p44 = scmp.eq.s32.totalorder %s20, 1
      %p45 = por %p43, %p44
      %p46 = scmp.ne.s32.totalorder %s37, %s38
      %p47 = scmp.eq.s32.totalorder %s20, 0
      %p48 = por %p46, %p47
      %p49 = scmp.ne.s32.totalorder %s37, %s38
      %p50 = scmp.eq.s32.totalorder %s21, 1
      %p51 = por %p49, %p50
      %p53 = scmp.ne.s32.totalorder %s38, %s52
      %p54 = scmp.eq.s32.totalorder %s21, 0
      %p55 = por %p53, %p54
      %s56 = ssub.s32 %s22, %s34
      %s57 = ssub.s32 %s23, %s30
      %s58 = sor.u32 %s56, %s57
      %p59 = scmp.eq.s32.totalorder %s58, 0
      %s61 = sadd.s32 %s60, 1
      %s62 = scalar_select %p59, %s60, %s61
      %p65 = pneg %p59
      %p66 = scmp.eq.s32.totalorder %s15, 1
      %p67 = por %p65, %p66
      %p68 = scmp.ne.s32.totalorder %s60, %s63
      %p69 = scmp.eq.s32.totalorder %s15, 0
      %p70 = por %p68, %p69
      %p71 = scmp.ne.s32.totalorder %s60, %s63
      %p72 = scmp.eq.s32.totalorder %s20, 1
      %p73 = por %p71, %p72
      %p74 = scmp.ne.s32.totalorder %s63, %s64
      %p75 = scmp.eq.s32.totalorder %s20, 0
      %p76 = por %p74, %p75
      %p77 = scmp.ne.s32.totalorder %s63, %s64
      %p78 = scmp.eq.s32.totalorder %s21, 1
      %p79 = por %p77, %p78
      %p81 = scmp.ne.s32.totalorder %s64, %s80
      %p82 = scmp.eq.s32.totalorder %s21, 0
      %p83 = por %p81, %p82
      %s84 = ssub.s32 %s22, %s34
      %s85 = ssub.s32 %s23, %s30
      %s86 = sor.u32 %s84, %s85
      %p87 = scmp.eq.s32.totalorder %s86, 0
      %s89 = sadd.s32 %s88, 1
      %s90 = scalar_select %p87, %s88, %s89
      %p93 = pneg %p87
      %p94 = scmp.eq.s32.totalorder %s15, 1
      %p95 = por %p93, %p94
      %p96 = scmp.ne.s32.totalorder %s88, %s91
      %p97 = scmp.eq.s32.totalorder %s15, 0
      %p98 = por %p96, %p97
      %p99 = scmp.ne.s32.totalorder %s88, %s91
      %p100 = scmp.eq.s32.totalorder %s20, 1
      %p101 = por %p99, %p100
      %p102 = scmp.ne.s32.totalorder %s91, %s92
      %p103 = scmp.eq.s32.totalorder %s20, 0
      %p104 = por %p102, %p103
      %p105 = scmp.ne.s32.totalorder %s91, %s92
      %p106 = scmp.eq.s32.totalorder %s21, 1
      %p107 = por %p105, %p106
      %p109 = scmp.ne.s32.totalorder %s92, %s108
      %p110 = scmp.eq.s32.totalorder %s21, 0
      %p111 = por %p109, %p110
      %p112 = scmp.le.s32.totalorder 1, %s15
      %p113 = scmp.lt.s32.totalorder %s15, 3
      %p114 = pnand %p112, %p113
      %p115 = pneg %p114
      // Predicated region
      $region9: #{tpu_custom_call.1} parent=5 // pred_check
        _
      $region10: #{tpu_custom_call.1} parent=5 // pred_check_branch
        %117 = sbr.rel (%p114) target = $region12
      $region11: #{tpu_custom_call.1} parent=5 // pred_region
        %s118 = ssub.s32 %s15, 1
        // Predicated region
        $region13: #{tpu_custom_call.1} parent=11 // pred_check
          %p119 = pneg %p48
        $region14: #{tpu_custom_call.1} parent=11 // pred_check_branch
          %121 = sbr.rel (%p119) target = $region16
        $region15: #{tpu_custom_call.1} parent=11 // pred_region
          %s123 = ssub.s32 16, 16
          %124 = vsyncadd [#allocation5], %s123
          %127 = dma.hbm_to_smem %s0, 16, [#allocation2], [#allocation5]
        $region16: #{tpu_custom_call.1} parent=11 // pred_fallthru
          _
      $region12: #{tpu_custom_call.1} parent=5 // pred_fallthru
        _
      %p128 = scmp.lt.s32.totalorder %s15, 2
      // Predicated region
      $region17: #{tpu_custom_call.1} parent=5 // pred_check
        %p129 = pneg %p128
      $region18: #{tpu_custom_call.1} parent=5 // pred_check_branch
        %131 = sbr.rel (%p129) target = $region20
      $region19: #{tpu_custom_call.1} parent=5 // pred_region
        // Predicated region
        $region21: #{tpu_custom_call.1} parent=19 // pred_check
          %p132 = pneg %p70
        $region22: #{tpu_custom_call.1} parent=19 // pred_check_branch
          %134 = sbr.rel (%p132) target = $region24
        $region23: #{tpu_custom_call.1} parent=19 // pred_region
          %s135 = sand.u32 %s60, 1
          %s136 = scalar_lea.sflag [#allocation3], %s135
          %s137 = sand.u32 %s60, 1
          %s138 = smul.addr %s137, 32
          %s139 = scalar_lea.vmem [#allocation6], %s138
          %s141 = ssub.s32 512, 512
          %142 = vsyncadd %s136, %s141
          %s143 = smul.addr %s23, 4
          %s144 = smul.addr %s22, 4
          %s145 = sadd.s32 %s143, %s144
          %s146 = smul.addr %s145, 128
          %s147 = scalar_lea.hbm %s1, %s146
          %s149 = sshll.u32 %s139, 4
          %s150 = int_to_ptr.vmem [resolvable:$true] %s149
          %152 = dma.hbm_to_vmem [thread:$0]  %s147, 512, %s150, %s136
        $region24: #{tpu_custom_call.1} parent=19 // pred_fallthru
          _
      $region20: #{tpu_custom_call.1} parent=5 // pred_fallthru
        _
      %p153 = scmp.le.s32.totalorder 1, %s15
      %p154 = scmp.lt.s32.totalorder %s15, 3
      %p155 = pnand %p153, %p154
      %p156 = pneg %p155
      // Predicated region
      $region25: #{tpu_custom_call.1} parent=5 // pred_check
        _
      $region26: #{tpu_custom_call.1} parent=5 // pred_check_branch
        %158 = sbr.rel (%p155) target = $region28
      $region27: #{tpu_custom_call.1} parent=5 // pred_region
        %s159 = ssub.s32 %s15, 1
        // Predicated region
        $region29: #{tpu_custom_call.1} parent=27 // pred_check
          %p160 = pneg %p48
        $region30: #{tpu_custom_call.1} parent=27 // pred_check_branch
          %162 = sbr.rel (%p160) target = $region32
        $region31: #{tpu_custom_call.1} parent=27 // pred_region
          %163 = dma.done [#allocation5], 16
        $region32: #{tpu_custom_call.1} parent=27 // pred_fallthru
          _
        %s164 = sand.u32 %s63, 1
        %s165 = scalar_lea.sflag [#allocation3], %s164
        %s166 = sand.u32 %s63, 1
        %s167 = smul.addr %s166, 32
        %s168 = scalar_lea.vmem [#allocation6], %s167
        // Predicated region
        $region33: #{tpu_custom_call.1} parent=27 // pred_check
          %p169 = pneg %p76
        $region34: #{tpu_custom_call.1} parent=27 // pred_check_branch
          %171 = sbr.rel (%p169) target = $region36
        $region35: #{tpu_custom_call.1} parent=27 // pred_region
          %172 = dma.done %s165, 512
        $region36: #{tpu_custom_call.1} parent=27 // pred_fallthru
          _
        %173 = sfence
        %p174 = pneg %p48
        %p175 = pneg %p45
        %s176 = sand.u32 %s63, 1
        %s177 = scalar_lea.sflag [#allocation3], %s176
        %s178 = sand.u32 %s63, 1
        %s179 = smul.addr %s178, 32
        %s180 = scalar_lea.vmem [#allocation6], %s179
        %p181 = pneg %p76
        %p182 = pneg %p73
        %p183 = pneg %p104
        %p184 = pneg %p101
        %s185 = sand.u32 %s91, 1
        %s186 = scalar_lea.sflag [#allocation4], %s185
        %s187 = sand.u32 %s91, 1
        %s188 = smul.addr %s187, 32
        %s189 = scalar_lea.vmem [#allocation7], %s188
        %s190 = sld [smem:[#allocation2 + %s24]]
        %v191 = vld [vmem:[%s168] sm:$0xff]
        %v192 = vld [vmem:[%s168 + $0x8] sm:$0xff]
        %v193 = vld [vmem:[%s168 + $0x10] sm:$0xff]
        %v194 = vld [vmem:[%s168 + $0x18] sm:$0xff]
        %v195 = vmax.f32 %v191, 1e-10
        %v196 = vmax.f32 %v192, 1e-10
        %v197 = vmax.f32 %v193, 1e-10
        %v198 = vmax.f32 %v194, 1e-10
        %v199 = vlog2.pop %v195
        %v200 = vmul.f32 %v199, 0.6931472
        %v201 = vlog2.pop %v196
        %v202 = vmul.f32 %v201, 0.6931472
        %v203 = vlog2.pop %v197
        %v204 = vmul.f32 %v203, 0.6931472
        %v205 = vlog2.pop %v198
        %v206 = vmul.f32 %v205, 0.6931472
        %v207 = vmul.f32 %v200, 0.4342945
        %v208 = vmul.f32 %v202, 0.4342945
        %v209 = vmul.f32 %v204, 0.4342945
        %v210 = vmul.f32 %v206, 0.4342945
        %v211 = vmul.f32 %v207, 10.0
        %v212 = vmul.f32 %v208, 10.0
        %v213 = vmul.f32 %v209, 10.0
        %v214 = vmul.f32 %v210, 10.0
        %v215 = vstv %s190
        %v216 = vmax.f32 %v211, %v215
        %v217 = vmax.f32 %v212, %v215
        %v218 = vmax.f32 %v213, %v215
        %v219 = vmax.f32 %v214, %v215
        %220 = vst [vmem:[%s189] sm:$0xff] %v216
        %221 = vst [vmem:[%s189 + $0x8] sm:$0xff] %v217
        %222 = vst [vmem:[%s189 + $0x10] sm:$0xff] %v218
        %223 = vst [vmem:[%s189 + $0x18] sm:$0xff] %v219
        %s224 = sand.u32 %s91, 1
        %s225 = scalar_lea.sflag [#allocation4], %s224
        %s226 = sand.u32 %s91, 1
        %s227 = smul.addr %s226, 32
        %s228 = scalar_lea.vmem [#allocation7], %s227
        // Predicated region
        $region37: #{tpu_custom_call.1} parent=27 // pred_check
          %p229 = pneg %p101
        $region38: #{tpu_custom_call.1} parent=27 // pred_check_branch
          %231 = sbr.rel (%p229) target = $region40
        $region39: #{tpu_custom_call.1} parent=27 // pred_region
          %s233 = ssub.s32 512, 512
          %234 = vsyncadd %s225, %s233
          %s235 = smul.addr %s25, 4
          %s236 = smul.addr %s24, 4
          %s237 = sadd.s32 %s235, %s236
          %s238 = smul.addr %s237, 128
          %s239 = scalar_lea.hbm %s2, %s238
          %s241 = sshll.u32 %s228, 4
          %s242 = int_to_ptr.vmem [resolvable:$true] %s241
          %244 = dma.vmem_to_hbm [thread:$0]  %s242, 512, %s239, %s225
        $region40: #{tpu_custom_call.1} parent=27 // pred_fallthru
          _
      $region28: #{tpu_custom_call.1} parent=5 // pred_fallthru
        _
      %p245 = scmp.le.s32.totalorder 2, %s15
      // Predicated region
      $region41: #{tpu_custom_call.1} parent=5 // pred_check
        %p246 = pneg %p245
      $region42: #{tpu_custom_call.1} parent=5 // pred_check_branch
        %248 = sbr.rel (%p246) target = $region44
      $region43: #{tpu_custom_call.1} parent=5 // pred_region
        %s249 = ssub.s32 %s15, 2
        // Predicated region
        $region45: #{tpu_custom_call.1} parent=43 // pred_check
          %p250 = pneg %p107
        $region46: #{tpu_custom_call.1} parent=43 // pred_check_branch
          %252 = sbr.rel (%p250) target = $region48
        $region47: #{tpu_custom_call.1} parent=43 // pred_region
          %s253 = sand.u32 %s92, 1
          %s254 = scalar_lea.sflag [#allocation4], %s253
          %s255 = sand.u32 %s92, 1
          %s256 = smul.addr %s255, 32
          %s257 = scalar_lea.vmem [#allocation7], %s256
          %258 = dma.done %s254, 512
        $region48: #{tpu_custom_call.1} parent=43 // pred_fallthru
          _
      $region44: #{tpu_custom_call.1} parent=5 // pred_fallthru
        _
    $region6: #{tpu_custom_call.1} parent=1 // loop_footer
      %s19 = sadd.s32 1, %s15
    $region7: #{tpu_custom_call.1} parent=1 // loop_footer_branch
      %14 = sbr.rel target = $region3
    $region8: #{tpu_custom_call.1} parent=1 // loop_exit
      _
    %259 = vsyncpa [#allocation3], 1
    %s260 = scalar_lea.sflag [#allocation3], 1
    %261 = vsyncpa %s260, 1
    %262 = vsyncpa [#allocation4], 1
    %s263 = scalar_lea.sflag [#allocation4], 1
    %264 = vsyncpa %s263, 1
    %265 = vsyncpa [#allocation5], 1
    %s266 = scalar_lea.sflag [#allocation5], 1
    %267 = vsyncpa %s266, 1

</llo_original>
